<compile_context>
chip_gen: v7x
topology: tpu7x:2x2x1
jax: 0.10.0
libtpu: 0.0.40
codegen_flags: <defaults>
</compile_context>

<pallas_src>
import functools

import jax
import jax.numpy as jnp
from jax.experimental import pallas as pl
from jax.experimental.pallas import tpu as pltpu


# ----------------------------- Pallas kernel -----------------------------

def _grad_kernel(xT_ref, wT_ref, bT_ref, m_ref, out_ref):
    # xT : (D, TN)           bf16   -- input tile, N on the lane axis
    # wT : (H, D)            bf16   -- resident
    # bT : (H, 1)            f32    -- resident, lane-broadcast bias
    # m  : (DY + D*DY, 2H)   bf16   -- resident, [[V.T, 0], [0, Gmat.T]]
    # out: (DY + D*DY, TN)   f32    -- rows [0:DY] = y.T, rows [DY:] = grad.T
    pre = jnp.dot(wT_ref[...], xT_ref[...],
                  preferred_element_type=jnp.float32) + bT_ref[...]     # (H, TN)
    t = jnp.tanh(pre)                                                   # f32
    # Stack activations and tanh' along sublanes (H=32 boundary -> aligned),
    # then a single MXU matmul produces y.T and the flattened Jacobian.T:
    #   out[0:DY]          = V.T    @ t
    #   out[DY + d*DY + i] = Gmat.T @ (1 - t^2)
    stacked = jnp.concatenate([t, 1.0 - t * t], axis=0).astype(jnp.bfloat16)
    out_ref[...] = jnp.dot(m_ref[...], stacked,
                           preferred_element_type=jnp.float32)


# ----------------------------- tiling helpers -----------------------------

def _min_grid_steps() -> int:
    """>= 2 'parallel' grid steps only on 2-TensorCore chips (v7x)."""
    try:
        kind = jax.devices()[0].device_kind.lower()
    except Exception:
        return 1
    return 2 if "7" in kind else 1


def _pick_tile_n(n: int, min_steps: int) -> int:
    """Pick the lane-axis tile.  Tiles must be multiples of 128 (lane width)
    or the full extent.  Prefer the largest divisor <= 16384 that still gives
    `min_steps` grid steps; otherwise one full-extent block (Pallas handles a
    full-extent last dim that is not a multiple of 128)."""
    if n % 128 != 0:
        return n  # single full-extent block; demo sizes keep this tiny
    cap = min(n, 16384)
    divs = [t for t in range(128, cap + 1, 128) if n % t == 0]
    if not divs:
        return n
    multi = [t for t in divs if n // t >= min_steps]
    return max(multi) if multi else max(divs)


# ----------------------------- jitted wrapper -----------------------------

@functools.partial(jax.jit, static_argnames=("tile_n",))
def _model_and_grad(x, wT_bf, bT, m_bf, *, tile_n):
    n, d = x.shape
    h = wT_bf.shape[0]
    rows = m_bf.shape[0]          # DY + D*DY
    dy = rows // (d + 1)
    assert n % tile_n == 0 or tile_n == n

    # Lane-dense input layout: (D, N), bf16 (cheap transpose+cast inside jit).
    xT = x.T.astype(jnp.bfloat16)

    out = pl.pallas_call(
        _grad_kernel,
        out_shape=jax.ShapeDtypeStruct((rows, n), jnp.float32),
        grid_spec=pltpu.PrefetchScalarGridSpec(
            num_scalar_prefetch=0,
            grid=(n // tile_n,),
            in_specs=[
                pl.BlockSpec((d, tile_n), lambda i: (0, i)),      # x.T tile
                pl.BlockSpec((h, d), lambda i: (0, 0)),           # W.T (resident)
                pl.BlockSpec((h, 1), lambda i: (0, 0)),           # b.T (resident)
                pl.BlockSpec((rows, 2 * h), lambda i: (0, 0)),    # M   (resident)
            ],
            out_specs=pl.BlockSpec((rows, tile_n), lambda i: (0, i)),
        ),
        compiler_params=pltpu.CompilerParams(
            dimension_semantics=("parallel",),
            # Lane-dense padded footprint: double-buffered x tile (D*tile_n*2B)
            # + out tile (~16*tile_n*4B) + tiny residents -> ~2.3 MiB even at
            # tile_n = 16384, comfortably inside v7x's 64 MiB physical VMEM.
            vmem_limit_bytes=32 * 1024 * 1024,
        ),
    )(xT, wT_bf, bT, m_bf)

    # Free views back to the PyTorch-facing layout.
    y = out[:dy, :].T                       # (N, DY)
    g = out[dy:, :].T.reshape(n, d, dy)     # (N, D, DY), row-major d*DY + i
    return y, g


# ----------------------------- module wrapper -----------------------------

class Grad:
    """JAX/Pallas analogue of cace.modules.grad.Grad.

    # TODO(synk): torch.autograd.grad on an arbitrary precomputed tape has no
    # direct Pallas equivalent; this wrapper owns the synthetic model params
    # (W, b, V) and computes y and its ones-VJP gradient analytically inside
    # a single Pallas kernel.
    """

    def __init__(self, y_key: str, x_key: str, output_key: str = "gradient",
                 params=None):
        self.y_key = y_key
        self.x_key = x_key
        self.output_key = output_key
        self.required_derivatives = [self.x_key]
        self.model_outputs = [self.output_key]
        if params is not None:
            self._prepare(params)

    def _prepare(self, params):
        """One-time, off-hot-path preprocessing of the synthetic model params."""
        w, b, v = params                      # (D,H), (1,H), (H,DY)
        d, h = w.shape
        dy = v.shape[1]
        # Gmat[h, d*DY + i] = W[d, h] * V[h, i]
        gmat_t = (w.T[:, :, None] * v[:, None, :]).reshape(h, d * dy).T  # (D*DY, H)
        m = jnp.zeros((dy + d * dy, 2 * h), jnp.float32)
        m = m.at[:dy, :h].set(v.T)
        m = m.at[dy:, h:].set(gmat_t)
        self._wT_bf = jnp.asarray(w).T.astype(jnp.bfloat16)       # (H, D)
        self._bT = jnp.asarray(b).reshape(h, 1).astype(jnp.float32)
        self._m_bf = m.astype(jnp.bfloat16)                       # (DY+D*DY, 2H)
        self._dy = dy
        self._d = d

    def __call__(self, data, training: bool = False, output_index=None):
        x = data[self.x_key]
        tile_n = _pick_tile_n(x.shape[0], _min_grid_steps())
        y, g = _model_and_grad(x, self._wT_bf, self._bT, self._m_bf,
                               tile_n=tile_n)
        if self._dy == 1:                        # 1-D y branch of the module
            data[self.y_key] = y[:, 0]
            data[self.output_key] = g[:, :, 0]   # (N, D)
        else:                                    # 2-D y branch: stack axis=2
            data[self.y_key] = y
            data[self.output_key] = g            # (N, D, DY)
        return data

    def __repr__(self):
        return f"{self.__class__.__name__} (function={self.y_key}, variable={self.x_key},) "


# ---------------- references (pure JAX) ----------------

def _model_ref(x, w, b, v):
    return jnp.tanh(x @ w + b) @ v               # (N, DY), f32


def _grad_ref(x, w, b, v):
    dy = v.shape[1]
    cols = [
        jax.grad(lambda xx, i=i: jnp.sum(_model_ref(xx, w, b, v)[:, i]))(x)
        for i in range(dy)
    ]
    return jnp.stack(cols, axis=2)               # (N, D, DY)


def _kernel_math_ref(x, wT_bf, bT, m_bf, dy, d):
    """Pure-JAX mirror of the kernel's bf16/f32 arithmetic (tight parity)."""
    pre = jnp.dot(wT_bf, x.T.astype(jnp.bfloat16),
                  preferred_element_type=jnp.float32) + bT
    t = jnp.tanh(pre)
    stacked = jnp.concatenate([t, 1.0 - t * t], axis=0).astype(jnp.bfloat16)
    out = jnp.dot(m_bf, stacked, preferred_element_type=jnp.float32)
    n = x.shape[0]
    return out[:dy].T, out[dy:].T.reshape(n, d, dy)


if __name__ == "__main__":
    N, D, H = 512, 4, 32   # N multiple of 128: 1 block on v5e/v6e, 2 on v7x

    key = jax.random.PRNGKey(0)
    kx, kw, kb, kv = jax.random.split(key, 4)
    x = jax.random.normal(kx, (N, D), dtype=jnp.float32)
    w = 0.5 * jax.random.normal(kw, (D, H), dtype=jnp.float32)
    b = 0.1 * jax.random.normal(kb, (1, H), dtype=jnp.float32)

    ok = True
    for DY in (2, 1):  # exercise both the 2-D and 1-D y branches
        v = jax.random.normal(kv, (H, DY), dtype=jnp.float32)
        mod = Grad(y_key="y", x_key="x", output_key="gradient", params=(w, b, v))
        data = mod({"x": x})
        y = jax.block_until_ready(data["y"])
        grad = jax.block_until_ready(data["gradient"])

        # (a) tight parity against a pure-JAX mirror of the kernel's bf16 math
        y_bf, g_bf = _kernel_math_ref(x, mod._wT_bf, mod._bT, mod._m_bf, DY, D)
        if DY == 1:
            y_bf, g_bf = y_bf[:, 0], g_bf[:, :, 0]
        ok &= bool(jnp.allclose(y, y_bf, atol=1e-3, rtol=1e-3))
        ok &= bool(jnp.allclose(grad, g_bf, atol=1e-3, rtol=1e-3))

        # (b) semantic check vs f32 autodiff (tolerance covers bf16 operand
        #     quantization of the MXU inputs)
        y_ref = _model_ref(x, w, b, v)
        g_ref = _grad_ref(x, w, b, v)
        if DY == 1:
            y_ref, g_ref = y_ref[:, 0], g_ref[:, :, 0]
        ok &= bool(jnp.allclose(y, y_ref, atol=8e-2, rtol=5e-2))
        ok &= bool(jnp.allclose(grad, g_ref, atol=8e-2, rtol=5e-2))

    if ok:
        print("KERNEL_OK")
    else:
        print("MISMATCH")
</pallas_src>

<mosaic_0001>
module attributes {stable_mosaic.version = 11 : i64} {
  func.func @_grad_kernel(%arg0: i32, %arg1: memref<4x512xbf16, #tpu.memory_space<vmem>>, %arg2: memref<32x4xbf16, #tpu.memory_space<vmem>>, %arg3: memref<32x1xf32, #tpu.memory_space<vmem>>, %arg4: memref<10x64xbf16, #tpu.memory_space<vmem>>, %arg5: memref<10x512xf32, #tpu.memory_space<vmem>>) attributes {dimension_semantics = [#tpu.dimension_semantics<parallel>], iteration_bounds = array<i64: 1>, scalar_prefetch = 0 : i64, scratch_operands = 0 : i64, tpu.core_type = #tpu.core_type<tc>, window_params = [{transform_indices = @transform_0, window_bounds = array<i64: 4, 512>}, {pipeline_mode = #tpu.pipeline_mode<synchronous>, transform_indices = @transform_1, window_bounds = array<i64: 32, 4>}, {pipeline_mode = #tpu.pipeline_mode<synchronous>, transform_indices = @transform_2, window_bounds = array<i64: 32, 1>}, {pipeline_mode = #tpu.pipeline_mode<synchronous>, transform_indices = @transform_3, window_bounds = array<i64: 10, 64>}, {transform_indices = @transform_4, window_bounds = array<i64: 10, 512>}]} {
    %c0 = arith.constant 0 : index
    %c0_0 = arith.constant 0 : index
    %0 = vector.load %arg2[%c0, %c0_0] : memref<32x4xbf16, #tpu.memory_space<vmem>>, vector<32x4xbf16>
    %c0_1 = arith.constant 0 : index
    %c0_2 = arith.constant 0 : index
    %1 = vector.load %arg1[%c0_1, %c0_2] : memref<4x512xbf16, #tpu.memory_space<vmem>>, vector<4x512xbf16>
    %cst = arith.constant dense<0.000000e+00> : vector<32x512xf32>
    %2 = tpu.matmul %0, %1, %cst {dimension_numbers = #tpu.dot_dimension_numbers<[1], [0], [0], [1], [0, 0, 1, 1], [], []>} : vector<32x4xbf16>, vector<4x512xbf16>, vector<32x512xf32> -> vector<32x512xf32>
    %c0_3 = arith.constant 0 : index
    %c0_4 = arith.constant 0 : index
    %3 = vector.load %arg3[%c0_3, %c0_4] : memref<32x1xf32, #tpu.memory_space<vmem>>, vector<32x1xf32>
    %4 = vector.broadcast %3 : vector<32x1xf32> to vector<32x512xf32>
    %5 = arith.addf %2, %4 : vector<32x512xf32>
    %6 = math.tanh %5 : vector<32x512xf32>
    %7 = arith.mulf %6, %6 : vector<32x512xf32>
    %cst_5 = arith.constant 1.000000e+00 : f32
    %8 = vector.broadcast %cst_5 : f32 to vector<32x512xf32>
    %9 = arith.subf %8, %7 : vector<32x512xf32>
    %10 = tpu.concatenate %6, %9 in 0 : vector<32x512xf32>, vector<32x512xf32> -> vector<64x512xf32>
    %11 = arith.truncf %10 : vector<64x512xf32> to vector<64x512xbf16>
    %c0_6 = arith.constant 0 : index
    %c0_7 = arith.constant 0 : index
    %12 = vector.load %arg4[%c0_6, %c0_7] : memref<10x64xbf16, #tpu.memory_space<vmem>>, vector<10x64xbf16>
    %cst_8 = arith.constant dense<0.000000e+00> : vector<10x512xf32>
    %13 = tpu.matmul %12, %11, %cst_8 {dimension_numbers = #tpu.dot_dimension_numbers<[1], [0], [0], [1], [0, 0, 1, 1], [], []>} : vector<10x64xbf16>, vector<64x512xbf16>, vector<10x512xf32> -> vector<10x512xf32>
    %c0_9 = arith.constant 0 : index
    %c0_10 = arith.constant 0 : index
    %14 = vector.load %arg5[%c0_9, %c0_10] : memref<10x512xf32, #tpu.memory_space<vmem>>, vector<10x512xf32>
    tpu.vector_store %arg5[%c0_9, %c0_10], %13 {strides = array<i32>} : memref<10x512xf32, #tpu.memory_space<vmem>>, vector<10x512xf32>,
    return
  }
  func.func @transform_0(%arg0: i32) -> (i32, i32) {
    %c0_i32 = arith.constant 0 : i32
    %c0_i32_0 = arith.constant 0 : i32
    return %c0_i32, %arg0 : i32, i32
  }
  func.func @transform_1(%arg0: i32) -> (i32, i32) {
    %c0_i32 = arith.constant 0 : i32
    %c0_i32_0 = arith.constant 0 : i32
    %c0_i32_1 = arith.constant 0 : i32
    return %c0_i32, %c0_i32_0 : i32, i32
  }
  func.func @transform_2(%arg0: i32) -> (i32, i32) {
    %c0_i32 = arith.constant 0 : i32
    %c0_i32_0 = arith.constant 0 : i32
    %c0_i32_1 = arith.constant 0 : i32
    return %c0_i32, %c0_i32_0 : i32, i32
  }
  func.func @transform_3(%arg0: i32) -> (i32, i32) {
    %c0_i32 = arith.constant 0 : i32
    %c0_i32_0 = arith.constant 0 : i32
    %c0_i32_1 = arith.constant 0 : i32
    return %c0_i32, %c0_i32_0 : i32, i32
  }
  func.func @transform_4(%arg0: i32) -> (i32, i32) {
    %c0_i32 = arith.constant 0 : i32
    %c0_i32_0 = arith.constant 0 : i32
    return %c0_i32, %arg0 : i32, i32
  }
}

</mosaic_0001>

<llo_original>
// kernel: _model_and_grad.1
$region0: #{_model_and_grad.1}
  #allocation0 [shape = 'u32[]', space=smem, size = 0x4, offset = 0x4, fixed_abs, tag = 'smem constant byte address 0x4 - core index']
  #allocation1 [shape = 'u32[144,128]{1,0:T(1,128)}', space=vmem, size = 0x12000, scoped, tag = 'internal scratch']
  %s0 = inlined_call_operand.vmem [shape: bf16[4,512], index: 0, kind: input, shape index: {}]
  %s1 = inlined_call_operand.vmem [shape: bf16[32,4], index: 1, kind: input, shape index: {}]
  %s2 = inlined_call_operand.vmem [shape: f32[32,1], index: 2, kind: input, shape index: {}]
  %s3 = inlined_call_operand.vmem [shape: bf16[10,64], index: 3, kind: input, shape index: {}]
  %s4 = inlined_call_operand.vmem [shape: f32[10,512], index: 4, kind: output, shape index: {}]
  %s5 = sld [smem:[#allocation0]]
  $region26: #{_model_and_grad.1} parent=0
    _
  %s7 = ssub.s32 1, %s5
  %s8 = scalar_select 0, %s7, %s5
  // Predicated region
  $region2: #{_model_and_grad.1} parent=0 // pred_check
    _
  $region3: #{_model_and_grad.1} parent=0 // pred_check_branch
    %10 = sbr.rel (0) target = $region5
  $region4: #{_model_and_grad.1} parent=0 // pred_region
    _
  $region5: #{_model_and_grad.1} parent=0 // pred_fallthru
    _
  // Predicated region
  $region6: #{_model_and_grad.1} parent=0 // pred_check
    _
  $region7: #{_model_and_grad.1} parent=0 // pred_check_branch
    %12 = sbr.rel (0) target = $region9
  $region8: #{_model_and_grad.1} parent=0 // pred_region
    _
  $region9: #{_model_and_grad.1} parent=0 // pred_fallthru
    _
  // Predicated region
  $region10: #{_model_and_grad.1} parent=0 // pred_check
    _
  $region11: #{_model_and_grad.1} parent=0 // pred_check_branch
    %14 = sbr.rel (0) target = $region13
  $region12: #{_model_and_grad.1} parent=0 // pred_region
    _
  $region13: #{_model_and_grad.1} parent=0 // pred_fallthru
    _
  // Predicated region
  $region14: #{_model_and_grad.1} parent=0 // pred_check
    _
  $region15: #{_model_and_grad.1} parent=0 // pred_check_branch
    %16 = sbr.rel (0) target = $region17
  $region16: #{_model_and_grad.1} parent=0 // pred_region
    _
  $region17: #{_model_and_grad.1} parent=0 // pred_fallthru
    _
  %v18 = vld [vmem:[%s1] sm:$0xf]
  %v19 = vld [vmem:[%s1 + $0x4] sm:$0xf]
  %v20 = vld [vmem:[%s1 + $0x8] sm:$0xf]
  %v21 = vld [vmem:[%s1 + $0xc] sm:$0xf]
  %v22 = vld [vmem:[%s0] sm:$0xff]
  %v23 = vld [vmem:[%s2] sm:$0xff]
  %v24 = vld [vmem:[%s2 + $0x8] sm:$0xff]
  %v25 = vld [vmem:[%s2 + $0x10] sm:$0xff]
  %v26 = vld [vmem:[%s2 + $0x18] sm:$0xff]
  %28 = vset.pattern.permute.xlu0 0
  %29 = vperm.xlu0 %28, %v23
  %v30 = vpop.permute.xlu0 %29
  %33 = vset.pattern.permute.xlu0 0
  %34 = vperm.xlu0 %33, %v24
  %v35 = vpop.permute.xlu0 %34
  %38 = vset.pattern.permute.xlu0 0
  %39 = vperm.xlu0 %38, %v25
  %v40 = vpop.permute.xlu0 %39
  %43 = vset.pattern.permute.xlu0 0
  %44 = vperm.xlu0 %43, %v26
  %v45 = vpop.permute.xlu0 %44
  %v51 = vunpack.c.l.b16 %v18
  %v52 = vunpack.c.l.b16 %v19
  %v53 = vunpack.c.l.b16 %v20
  %v54 = vunpack.c.l.b16 %v21
  %v55 = vpack.c.b16 %v52, %v51
  %v56 = vpack.c.b16 %v54, %v53
  %v58 = vcombine.high %v22, %v22
  %v60 = vunpack.c.l.s4 1983009808
  %v61 = vunpack.c.0.s8 %v60
  %v62 = vlaneseq
  %v63 = vshrl.u32 %v62, 7
  %v64 = vsub.s32 %v61, %v63
  %v65 = vrot.slane %v22, %v64
  %v67 = vunpack.c.l.s4 1983009808
  %v68 = vunpack.c.0.s8 %v67
  %v69 = vlaneseq
  %v70 = vshrl.u32 %v69, 7
  %v71 = vsub.s32 %v68, %v70
  %v72 = vrot.slane %v58, %v71
  %v73 = vcombine.high %v65, %v65
  %v74 = vcombine.high %v72, %v72
  %vm75 = vcmask 31744
  %v77 = vsel %vm75, %v55, 0
  %v80 = vsel %vm75, %v56, 0
  %vm82 = vcmask 1041408
  %v84 = vsel %vm82, %v65, 0
  %v87 = vsel %vm82, %v73, 0
  %v90 = vsel %vm82, %v72, 0
  %v93 = vsel %vm82, %v74, 0
  %95 = vmatprep.subr.bf16.mxu0 %v87
  %96 = vmatpush1.bf16.msra.mxu0 %v84
  %97 = vmatprep.subr.bf16.mxu0 0
  %98 = vmatpush1.bf16.msra.mxu0 0
  %99 = vmatprep.subr.bf16.mxu0 0
  %100 = vmatpush1.bf16.msra.mxu0 0
  %101 = vmatprep.subr.bf16.mxu0 0
  %102 = vmatpush1.bf16.msra.mxu0 0
  %103 = vmatprep.subr.bf16.mxu0 0
  %104 = vmatpush1.bf16.msra.mxu0 0
  %105 = vmatprep.subr.bf16.mxu0 0
  %106 = vmatpush1.bf16.msra.mxu0 0
  %107 = vmatprep.subr.bf16.mxu0 0
  %108 = vmatpush1.bf16.msra.mxu0 0
  %109 = vmatprep.subr.bf16.mxu0 0
  %110 = vmatpush1.bf16.msra.mxu0 0
  %111 = vmatprep.subr.bf16.mxu0 0
  %112 = vmatpush1.bf16.msra.mxu0 0
  %113 = vmatprep.subr.bf16.mxu0 0
  %114 = vmatpush1.bf16.msra.mxu0 0
  %115 = vmatprep.subr.bf16.mxu0 0
  %116 = vmatpush1.bf16.msra.mxu0 0
  %117 = vmatprep.subr.bf16.mxu0 0
  %118 = vmatpush1.bf16.msra.mxu0 0
  %119 = vmatprep.subr.bf16.mxu0 0
  %120 = vmatpush1.bf16.msra.mxu0 0
  %121 = vmatprep.subr.bf16.mxu0 0
  %122 = vmatpush1.bf16.msra.mxu0 0
  %123 = vmatprep.subr.bf16.mxu0 0
  %124 = vmatpush1.bf16.msra.mxu0 0
  %125 = vmatprep.subr.bf16.mxu0 0
  %126 = vmatpush1.bf16.msra.mxu0 0
  %127 = vmatprep.mubr.bf16.mxu0 0
  %128 = vmatmul.mubr.bf16.gmra.mrb[0].mxu0 %v77
  %v129 = vpop.f32.mrb[0].mxu0
  %v130 = vadd.f32 %v30, %v129
  %v131 = vpop.f32.mrb[0].mxu0
  %v132 = vadd.f32 %v30, %v131
  %v133 = vpop.f32.mrb[0].mxu0
  %v134 = vadd.f32 %v35, %v133
  %v135 = vpop.f32.mrb[0].mxu0
  %v136 = vadd.f32 %v35, %v135
  %137 = vmatprep.mubr.bf16.mxu0 0
  %138 = vmatmul.mubr.bf16.gmra.mrb[0].mxu0 %v80
  %v139 = vpop.f32.mrb[0].mxu0
  %v140 = vadd.f32 %v40, %v139
  %v141 = vpop.f32.mrb[0].mxu0
  %v142 = vadd.f32 %v40, %v141
  %v143 = vpop.f32.mrb[0].mxu0
  %v144 = vadd.f32 %v45, %v143
  %v145 = vpop.f32.mrb[0].mxu0
  %v146 = vadd.f32 %v45, %v145
  %147 = vdwg.mxu0
  %148 = vmatprep.subr.bf16.mxu0 %v93
  %149 = vmatpush1.bf16.msra.mxu0 %v90
  %150 = vmatprep.subr.bf16.mxu0 0
  %151 = vmatpush1.bf16.msra.mxu0 0
  %152 = vmatprep.subr.bf16.mxu0 0
  %153 = vmatpush1.bf16.msra.mxu0 0
  %154 = vmatprep.subr.bf16.mxu0 0
  %155 = vmatpush1.bf16.msra.mxu0 0
  %156 = vmatprep.subr.bf16.mxu0 0
  %157 = vmatpush1.bf16.msra.mxu0 0
  %158 = vmatprep.subr.bf16.mxu0 0
  %159 = vmatpush1.bf16.msra.mxu0 0
  %160 = vmatprep.subr.bf16.mxu0 0
  %161 = vmatpush1.bf16.msra.mxu0 0
  %162 = vmatprep.subr.bf16.mxu0 0
  %163 = vmatpush1.bf16.msra.mxu0 0
  %164 = vmatprep.subr.bf16.mxu0 0
  %165 = vmatpush1.bf16.msra.mxu0 0
  %166 = vmatprep.subr.bf16.mxu0 0
  %167 = vmatpush1.bf16.msra.mxu0 0
  %168 = vmatprep.subr.bf16.mxu0 0
  %169 = vmatpush1.bf16.msra.mxu0 0
  %170 = vmatprep.subr.bf16.mxu0 0
  %171 = vmatpush1.bf16.msra.mxu0 0
  %172 = vmatprep.subr.bf16.mxu0 0
  %173 = vmatpush1.bf16.msra.mxu0 0
  %174 = vmatprep.subr.bf16.mxu0 0
  %175 = vmatpush1.bf16.msra.mxu0 0
  %176 = vmatprep.subr.bf16.mxu0 0
  %177 = vmatpush1.bf16.msra.mxu0 0
  %178 = vmatprep.subr.bf16.mxu0 0
  %179 = vmatpush1.bf16.msra.mxu0 0
  %180 = vmatprep.mubr.bf16.mxu0 0
  %181 = vmatmul.mubr.bf16.gmra.mrb[0].mxu0 %v77
  %v182 = vpop.f32.mrb[0].mxu0
  %v183 = vadd.f32 %v30, %v182
  %v184 = vpop.f32.mrb[0].mxu0
  %v185 = vadd.f32 %v30, %v184
  %v186 = vpop.f32.mrb[0].mxu0
  %v187 = vadd.f32 %v35, %v186
  %v188 = vpop.f32.mrb[0].mxu0
  %v189 = vadd.f32 %v35, %v188
  %190 = vmatprep.mubr.bf16.mxu0 0
  %191 = vmatmul.mubr.bf16.gmra.mrb[0].mxu0 %v80
  %v192 = vpop.f32.mrb[0].mxu0
  %v193 = vadd.f32 %v40, %v192
  %v194 = vpop.f32.mrb[0].mxu0
  %v195 = vadd.f32 %v40, %v194
  %v196 = vpop.f32.mrb[0].mxu0
  %v197 = vadd.f32 %v45, %v196
  %v198 = vpop.f32.mrb[0].mxu0
  %v199 = vadd.f32 %v45, %v198
  %200 = vdwg.mxu0
  %v201 = vtanh.pop %v130
  %v202 = vtanh.pop %v132
  %v203 = vtanh.pop %v183
  %v204 = vtanh.pop %v185
  %v205 = vtanh.pop %v134
  %v206 = vtanh.pop %v136
  %v207 = vtanh.pop %v187
  %v208 = vtanh.pop %v189
  %v209 = vtanh.pop %v140
  %v210 = vtanh.pop %v142
  %v211 = vtanh.pop %v193
  %v212 = vtanh.pop %v195
  %v213 = vtanh.pop %v144
  %v214 = vtanh.pop %v146
  %v215 = vtanh.pop %v197
  %v216 = vtanh.pop %v199
  %v217 = vmul.f32 %v201, %v201
  %v218 = vmul.f32 %v202, %v202
  %v219 = vmul.f32 %v203, %v203
  %v220 = vmul.f32 %v204, %v204
  %v221 = vmul.f32 %v205, %v205
  %v222 = vmul.f32 %v206, %v206
  %v223 = vmul.f32 %v207, %v207
  %v224 = vmul.f32 %v208, %v208
  %v225 = vmul.f32 %v209, %v209
  %v226 = vmul.f32 %v210, %v210
  %v227 = vmul.f32 %v211, %v211
  %v228 = vmul.f32 %v212, %v212
  %v229 = vmul.f32 %v213, %v213
  %v230 = vmul.f32 %v214, %v214
  %v231 = vmul.f32 %v215, %v215
  %v232 = vmul.f32 %v216, %v216
  %v233 = vsub.f32 1.0, %v217
  %v234 = vsub.f32 1.0, %v218
  %v235 = vsub.f32 1.0, %v219
  %v236 = vsub.f32 1.0, %v220
  %v237 = vsub.f32 1.0, %v221
  %v238 = vsub.f32 1.0, %v222
  %v239 = vsub.f32 1.0, %v223
  %v240 = vsub.f32 1.0, %v224
  %v241 = vsub.f32 1.0, %v225
  %v242 = vsub.f32 1.0, %v226
  %v243 = vsub.f32 1.0, %v227
  %v244 = vsub.f32 1.0, %v228
  %v245 = vsub.f32 1.0, %v229
  %v246 = vsub.f32 1.0, %v230
  %v247 = vsub.f32 1.0, %v231
  %v248 = vsub.f32 1.0, %v232
  %v249 = vpack.c.bf16 %v205, %v201
  %v250 = vpack.c.bf16 %v206, %v202
  %v251 = vpack.c.bf16 %v207, %v203
  %v252 = vpack.c.bf16 %v208, %v204
  %v253 = vpack.c.bf16 %v213, %v209
  %v254 = vpack.c.bf16 %v214, %v210
  %v255 = vpack.c.bf16 %v215, %v211
  %v256 = vpack.c.bf16 %v216, %v212
  %v257 = vpack.c.bf16 %v237, %v233
  %v258 = vpack.c.bf16 %v238, %v234
  %v259 = vpack.c.bf16 %v239, %v235
  %v260 = vpack.c.bf16 %v240, %v236
  %v261 = vpack.c.bf16 %v245, %v241
  %v262 = vpack.c.bf16 %v246, %v242
  %v263 = vpack.c.bf16 %v247, %v243
  %v264 = vpack.c.bf16 %v248, %v244
  %v265 = vld [vmem:[%s3] sm:$0xf]
  %v266 = vld [vmem:[%s3 + $0x4] sm:$0x1]
  %v269 = vunpack.c.l.b16 %v265
  %v270 = vunpack.c.l.b16 %v266
  %v271 = vpack.c.b16 %v270, %v269
  %vm272 = vcmask 523264
  %v274 = vsel %vm272, %v271, 0
  %276 = vmatprep.subr.bf16.mxu0 %v250
  %277 = vmatpush1.bf16.msra.mxu0 %v249
  %278 = vmatprep.subr.bf16.mxu0 %v254
  %279 = vmatpush1.bf16.msra.mxu0 %v253
  %280 = vmatprep.subr.bf16.mxu0 %v258
  %281 = vmatpush1.bf16.msra.mxu0 %v257
  %282 = vmatprep.subr.bf16.mxu0 %v262
  %283 = vmatpush1.bf16.msra.mxu0 %v261
  %284 = vmatprep.subr.bf16.mxu0 0
  %285 = vmatpush1.bf16.msra.mxu0 0
  %286 = vmatprep.subr.bf16.mxu0 0
  %287 = vmatpush1.bf16.msra.mxu0 0
  %288 = vmatprep.subr.bf16.mxu0 0
  %289 = vmatpush1.bf16.msra.mxu0 0
  %290 = vmatprep.subr.bf16.mxu0 0
  %291 = vmatpush1.bf16.msra.mxu0 0
  %292 = vmatprep.subr.bf16.mxu0 0
  %293 = vmatpush1.bf16.msra.mxu0 0
  %294 = vmatprep.subr.bf16.mxu0 0
  %295 = vmatpush1.bf16.msra.mxu0 0
  %296 = vmatprep.subr.bf16.mxu0 0
  %297 = vmatpush1.bf16.msra.mxu0 0
  %298 = vmatprep.subr.bf16.mxu0 0
  %299 = vmatpush1.bf16.msra.mxu0 0
  %300 = vmatprep.subr.bf16.mxu0 0
  %301 = vmatpush1.bf16.msra.mxu0 0
  %302 = vmatprep.subr.bf16.mxu0 0
  %303 = vmatpush1.bf16.msra.mxu0 0
  %304 = vmatprep.subr.bf16.mxu0 0
  %305 = vmatpush1.bf16.msra.mxu0 0
  %306 = vmatprep.subr.bf16.mxu0 0
  %307 = vmatpush1.bf16.msra.mxu0 0
  %308 = vmatprep.mubr.bf16.mxu0 0
  %309 = vmatmul.mubr.bf16.gmra.mrb[0].mxu0 %v274
  %v310 = vpop.f32.mrb[0].mxu0
  %v311 = vadd.f32 0.0, %v310
  %v312 = vpop.f32.mrb[0].mxu0
  %v313 = vadd.f32 0.0, %v312
  %v314 = vpop.f32.mrb[0].mxu0
  %v315 = vadd.f32 0.0, %v314
  %v316 = vpop.f32.mrb[0].mxu0
  %v317 = vadd.f32 0.0, %v316
  %318 = vdwg.mxu0
  %319 = vmatprep.subr.bf16.mxu0 %v252
  %320 = vmatpush1.bf16.msra.mxu0 %v251
  %321 = vmatprep.subr.bf16.mxu0 %v256
  %322 = vmatpush1.bf16.msra.mxu0 %v255
  %323 = vmatprep.subr.bf16.mxu0 %v260
  %324 = vmatpush1.bf16.msra.mxu0 %v259
  %325 = vmatprep.subr.bf16.mxu0 %v264
  %326 = vmatpush1.bf16.msra.mxu0 %v263
  %327 = vmatprep.subr.bf16.mxu0 0
  %328 = vmatpush1.bf16.msra.mxu0 0
  %329 = vmatprep.subr.bf16.mxu0 0
  %330 = vmatpush1.bf16.msra.mxu0 0
  %331 = vmatprep.subr.bf16.mxu0 0
  %332 = vmatpush1.bf16.msra.mxu0 0
  %333 = vmatprep.subr.bf16.mxu0 0
  %334 = vmatpush1.bf16.msra.mxu0 0
  %335 = vmatprep.subr.bf16.mxu0 0
  %336 = vmatpush1.bf16.msra.mxu0 0
  %337 = vmatprep.subr.bf16.mxu0 0
  %338 = vmatpush1.bf16.msra.mxu0 0
  %339 = vmatprep.subr.bf16.mxu0 0
  %340 = vmatpush1.bf16.msra.mxu0 0
  %341 = vmatprep.subr.bf16.mxu0 0
  %342 = vmatpush1.bf16.msra.mxu0 0
  %343 = vmatprep.subr.bf16.mxu0 0
  %344 = vmatpush1.bf16.msra.mxu0 0
  %345 = vmatprep.subr.bf16.mxu0 0
  %346 = vmatpush1.bf16.msra.mxu0 0
  %347 = vmatprep.subr.bf16.mxu0 0
  %348 = vmatpush1.bf16.msra.mxu0 0
  %349 = vmatprep.subr.bf16.mxu0 0
  %350 = vmatpush1.bf16.msra.mxu0 0
  %351 = vmatprep.mubr.bf16.mxu0 0
  %352 = vmatmul.mubr.bf16.gmra.mrb[0].mxu0 %v274
  %v353 = vpop.f32.mrb[0].mxu0
  %v354 = vadd.f32 0.0, %v353
  %v355 = vpop.f32.mrb[0].mxu0
  %v356 = vadd.f32 0.0, %v355
  %v357 = vpop.f32.mrb[0].mxu0
  %v358 = vadd.f32 0.0, %v357
  %v359 = vpop.f32.mrb[0].mxu0
  %v360 = vadd.f32 0.0, %v359
  %361 = vdwg.mxu0
  %362 = vst [vmem:[%s4] sm:$0xff] %v311
  %363 = vst [vmem:[%s4 + $0x8] sm:$0xff] %v313
  %364 = vst [vmem:[%s4 + $0x10] sm:$0xff] %v354
  %365 = vst [vmem:[%s4 + $0x18] sm:$0xff] %v356
  %366 = vst [vmem:[%s4 + $0x20] sm:$0x3] %v315
  %367 = vst [vmem:[%s4 + $0x28] sm:$0x3] %v317
  %368 = vst [vmem:[%s4 + $0x30] sm:$0x3] %v358
  %369 = vst [vmem:[%s4 + $0x38] sm:$0x3] %v360
  // Predicated region
  $region18: #{_model_and_grad.1} parent=0 // pred_check
    _
  $region19: #{_model_and_grad.1} parent=0 // pred_check_branch
    %371 = sbr.rel (0) target = $region21
  $region20: #{_model_and_grad.1} parent=0 // pred_region
    _
  $region21: #{_model_and_grad.1} parent=0 // pred_fallthru
    _
  // Predicated region
  $region22: #{_model_and_grad.1} parent=0 // pred_check
    _
  $region23: #{_model_and_grad.1} parent=0 // pred_check_branch
    %373 = sbr.rel (0) target = $region25
  $region24: #{_model_and_grad.1} parent=0 // pred_region
    _
  $region25: #{_model_and_grad.1} parent=0 // pred_fallthru
    _

</llo_original>
